<compile_context>
chip_gen: v6e
topology: v6e:2x2x1
jax: 0.10.0
libtpu: 0.0.40
codegen_flags: <defaults>
</compile_context>

<pallas_src>
import jax
import jax.numpy as jnp
from jax.experimental import pallas as pl
from jax.experimental.pallas import tpu as pltpu

LANE = 128


def _round_up(x, m):
    return (x + m - 1) // m * m


def _vmem_capacity_bytes():
    """Trace-time VMEM capacity query with a conservative (v7x per-TC) fallback."""
    try:
        info = pltpu.get_tpu_info()
        cap = getattr(info, "vmem_capacity_bytes", None)
        if cap:
            return int(cap)
    except Exception:
        pass
    return 64 * 1024 * 1024


def feature_extractor_kernel(x_ref, w1_ref, b1_ref, w2_ref, b2_ref, out_ref):
    # x is read from HBM once as f32; cast to bf16 in VMEM (nearly free, VPU slack).
    x = x_ref[...].astype(w1_ref.dtype)
    # fc1: bf16 MXU matmul with f32 accumulation, bias + ReLU in f32.
    h = jnp.dot(x, w1_ref[...], preferred_element_type=jnp.float32)
    h = jnp.maximum(h + b1_ref[...], 0.0)
    # BatchNorm1d (eval) is pre-folded into w2/b2 in the wrapper.
    o = jnp.dot(h.astype(w2_ref.dtype), w2_ref[...], preferred_element_type=jnp.float32)
    out_ref[...] = jnp.maximum(o + b2_ref[...], 0.0).astype(out_ref.dtype)


def feature_extractor(x, params, *, block_b=1024):
    """x: (B, input_size) float32. params: dict of f32 arrays in PyTorch layout
    (weights stored transposed: (in_features, out_features)). Returns bf16 (B, feature_dim)."""
    B, input_size = x.shape
    H = params["w1"].shape[1]
    feature_dim = params["w2"].shape[1]
    eps = 1e-5

    # ---- fold BatchNorm1d (eval) into fc2 (exact, done in f32) ----
    # BN(z) = scale*z + shift with scale = gamma/sqrt(var+eps), shift = beta - mean*scale
    # fc2(BN(z)) = z @ (scale[:,None]*W2) + (shift @ W2 + b2)
    scale = params["bn_gamma"] / jnp.sqrt(params["bn_var"] + eps)          # (1, H)
    shift = params["bn_beta"] - params["bn_mean"] * scale                  # (1, H)
    w2_fold = params["w2"] * scale.reshape(-1, 1)                          # (H, F)
    b2_fold = shift @ params["w2"] + params["b2"]                          # (1, F)

    # ---- pad lane dims (hidden, feature) to multiples of 128 (not beyond) ----
    Hp = _round_up(H, LANE)
    Fp = _round_up(feature_dim, LANE)
    w1 = jnp.zeros((input_size, Hp), jnp.float32).at[:, :H].set(params["w1"])
    b1 = jnp.zeros((1, Hp), jnp.float32).at[:, :H].set(params["b1"])
    w2 = jnp.zeros((Hp, Fp), jnp.float32).at[:H, :feature_dim].set(w2_fold)
    b2 = jnp.zeros((1, Fp), jnp.float32).at[:, :feature_dim].set(b2_fold)

    # bf16 HBM-resident weights (f32 accumulation inside the kernel). x stays f32 — it is
    # cast to bf16 inside the kernel to avoid an extra wrapper pass over HBM.
    w1 = w1.astype(jnp.bfloat16)
    w2 = w2.astype(jnp.bfloat16)

    # ---- batch tile selection (ragged last block; no batch padding of x) ----
    # Double-buffered VMEM budget: x tile (f32) + out tile (bf16) + weights/biases.
    weights_bytes = 2 * ((input_size * Hp + Hp * Fp) * 2 + (Hp + Fp) * 4)
    per_row_bytes = 2 * (input_size * 4 + Fp * 2)
    budget = int(0.75 * _vmem_capacity_bytes())            # leave compiler headroom
    tb_max = max(8, ((budget - weights_bytes) // per_row_bytes) // 8 * 8)
    TB = min(block_b, _round_up(B, 8), tb_max)
    # v7x megacore: make sure the "parallel" batch axis has >= 2 tiles when B allows it.
    if pl.cdiv(B, TB) == 1 and B > 8:
        TB = max(8, _round_up(pl.cdiv(B, 2), 8))
    num_blocks = pl.cdiv(B, TB)

    vmem_need = weights_bytes + per_row_bytes * TB
    vmem_limit = int(min(budget, max(vmem_need + (4 << 20), 32 << 20)))

    B_work = num_blocks * TB
    flops = 2 * B_work * (input_size * Hp + Hp * Fp)
    bytes_accessed = (B_work * input_size * 4 + B_work * Fp * 2        # x in (f32), out (bf16)
                      + input_size * Hp * 2 + Hp * Fp * 2              # weights (bf16)
                      + (Hp + Fp) * 4)                                 # biases (f32)

    # TODO(synk): when feature_dim << 128, benchmark a narrow (feature_dim) masked-store
    # out_spec against this lane-dense Fp=128 layout; keeping lane-dense + bf16 here.
    out = pl.pallas_call(
        feature_extractor_kernel,
        out_shape=jax.ShapeDtypeStruct((B, Fp), jnp.bfloat16),
        grid=(num_blocks,),
        in_specs=[
            pl.BlockSpec((TB, input_size), lambda i: (i, 0)),    # x: tiled over batch (f32)
            pl.BlockSpec((input_size, Hp), lambda i: (0, 0)),    # w1: VMEM-resident
            pl.BlockSpec((1, Hp), lambda i: (0, 0)),             # b1: resident
            pl.BlockSpec((Hp, Fp), lambda i: (0, 0)),            # w2 (BN-folded): resident
            pl.BlockSpec((1, Fp), lambda i: (0, 0)),             # b2 (BN-folded): resident
        ],
        out_specs=pl.BlockSpec((TB, Fp), lambda i: (i, 0)),
        compiler_params=pltpu.CompilerParams(
            dimension_semantics=("parallel",),
            vmem_limit_bytes=vmem_limit),
        cost_estimate=pl.CostEstimate(
            flops=flops, transcendentals=0, bytes_accessed=bytes_accessed),
    )(x, w1, b1, w2, b2)

    return out[:, :feature_dim]


def init_params(key, input_size, feature_dim, hidden=50):
    """Deterministic synthetic parameters, mirroring nn.Linear default init ranges."""
    k1, k2, k3, k4, k5, k6 = jax.random.split(key, 6)
    bound1 = 1.0 / jnp.sqrt(input_size)
    bound2 = 1.0 / jnp.sqrt(hidden)
    return {
        # Linear weights stored transposed: (in_features, out_features)
        "w1": jax.random.uniform(k1, (input_size, hidden), jnp.float32, -bound1, bound1),
        "b1": jax.random.uniform(k2, (1, hidden), jnp.float32, -bound1, bound1),
        "bn_gamma": jnp.ones((1, hidden), jnp.float32)
                    + 0.1 * jax.random.normal(k3, (1, hidden), jnp.float32),
        "bn_beta": 0.1 * jax.random.normal(k4, (1, hidden), jnp.float32),
        "bn_mean": 0.05 * jax.random.normal(k5, (1, hidden), jnp.float32),
        "bn_var": jnp.ones((1, hidden), jnp.float32),
        "w2": jax.random.uniform(k6, (hidden, feature_dim), jnp.float32, -bound2, bound2),
        "b2": jax.random.uniform(jax.random.fold_in(k6, 1), (1, feature_dim),
                                 jnp.float32, -bound2, bound2),
    }


def feature_extractor_ref(x, p):
    """Pure-JAX f32 reference matching the PyTorch module in eval mode."""
    h = jnp.maximum(x @ p["w1"] + p["b1"], 0.0)
    h = (h - p["bn_mean"]) / jnp.sqrt(p["bn_var"] + 1e-5) * p["bn_gamma"] + p["bn_beta"]
    return jnp.maximum(h @ p["w2"] + p["b2"], 0.0)


# TODO(synk): training-mode dropout (Bernoulli mask / 0.8 scaling) and batch-statistics BN
# are not reproduced; inference semantics are implemented instead.

if __name__ == "__main__":
    key = jax.random.PRNGKey(0)
    k_x, k_p = jax.random.split(key)

    B, input_size, feature_dim = 8, 32, 16
    x = jax.random.normal(k_x, (B, input_size), jnp.float32)
    params = init_params(k_p, input_size, feature_dim)

    out = feature_extractor(x, params)
    out = jax.block_until_ready(out)

    ref = feature_extractor_ref(x, params)
    assert out.shape == (B, feature_dim), out.shape
    assert out.dtype == jnp.bfloat16, out.dtype
    # bf16 matmul operands and bf16 output (f32 accumulation) -> relaxed tolerance vs f32 ref.
    out_f32 = out.astype(jnp.float32)
    max_err = float(jnp.max(jnp.abs(out_f32 - ref)))
    assert jnp.allclose(out_f32, ref, atol=5e-2, rtol=5e-2), max_err

    print("KERNEL_OK")
</pallas_src>

<mosaic_0001>
module attributes {stable_mosaic.version = 11 : i64} {
  func.func @feature_extractor_kernel(%arg0: i32, %arg1: memref<8x32xf32, #tpu.memory_space<vmem>>, %arg2: memref<32x128xbf16, #tpu.memory_space<vmem>>, %arg3: memref<1x128xf32, #tpu.memory_space<vmem>>, %arg4: memref<128x128xbf16, #tpu.memory_space<vmem>>, %arg5: memref<1x128xf32, #tpu.memory_space<vmem>>, %arg6: memref<8x128xbf16, #tpu.memory_space<vmem>>) attributes {dimension_semantics = [#tpu.dimension_semantics<parallel>], iteration_bounds = array<i64: 1>, scalar_prefetch = 0 : i64, scratch_operands = 0 : i64, tpu.core_type = #tpu.core_type<tc>, window_params = [{transform_indices = @transform_0, window_bounds = array<i64: 8, 32>}, {pipeline_mode = #tpu.pipeline_mode<synchronous>, transform_indices = @transform_1, window_bounds = array<i64: 32, 128>}, {pipeline_mode = #tpu.pipeline_mode<synchronous>, transform_indices = @transform_2, window_bounds = array<i64: 1, 128>}, {pipeline_mode = #tpu.pipeline_mode<synchronous>, transform_indices = @transform_3, window_bounds = array<i64: 128, 128>}, {pipeline_mode = #tpu.pipeline_mode<synchronous>, transform_indices = @transform_4, window_bounds = array<i64: 1, 128>}, {transform_indices = @transform_5, window_bounds = array<i64: 8, 128>}]} {
    %c0 = arith.constant 0 : index
    %c0_0 = arith.constant 0 : index
    %0 = vector.load %arg1[%c0, %c0_0] : memref<8x32xf32, #tpu.memory_space<vmem>>, vector<8x32xf32>
    %1 = arith.truncf %0 : vector<8x32xf32> to vector<8x32xbf16>
    %c0_1 = arith.constant 0 : index
    %c0_2 = arith.constant 0 : index
    %2 = vector.load %arg2[%c0_1, %c0_2] : memref<32x128xbf16, #tpu.memory_space<vmem>>, vector<32x128xbf16>
    %cst = arith.constant dense<0.000000e+00> : vector<8x128xf32>
    %3 = tpu.matmul %1, %2, %cst {dimension_numbers = #tpu.dot_dimension_numbers<[1], [0], [0], [1], [0, 0, 1, 1], [], []>} : vector<8x32xbf16>, vector<32x128xbf16>, vector<8x128xf32> -> vector<8x128xf32>
    %c0_3 = arith.constant 0 : index
    %c0_4 = arith.constant 0 : index
    %4 = vector.load %arg3[%c0_3, %c0_4] : memref<1x128xf32, #tpu.memory_space<vmem>>, vector<1x128xf32>
    %5 = vector.broadcast %4 : vector<1x128xf32> to vector<8x128xf32>
    %6 = arith.addf %3, %5 : vector<8x128xf32>
    %cst_5 = arith.constant 0.000000e+00 : f32
    %7 = vector.broadcast %cst_5 : f32 to vector<8x128xf32>
    %8 = arith.maximumf %6, %7 : vector<8x128xf32>
    %9 = arith.truncf %8 : vector<8x128xf32> to vector<8x128xbf16>
    %c0_6 = arith.constant 0 : index
    %c0_7 = arith.constant 0 : index
    %10 = vector.load %arg4[%c0_6, %c0_7] : memref<128x128xbf16, #tpu.memory_space<vmem>>, vector<128x128xbf16>
    %cst_8 = arith.constant dense<0.000000e+00> : vector<8x128xf32>
    %11 = tpu.matmul %9, %10, %cst_8 {dimension_numbers = #tpu.dot_dimension_numbers<[1], [0], [0], [1], [0, 0, 1, 1], [], []>} : vector<8x128xbf16>, vector<128x128xbf16>, vector<8x128xf32> -> vector<8x128xf32>
    %c0_9 = arith.constant 0 : index
    %c0_10 = arith.constant 0 : index
    %12 = vector.load %arg5[%c0_9, %c0_10] : memref<1x128xf32, #tpu.memory_space<vmem>>, vector<1x128xf32>
    %13 = vector.broadcast %12 : vector<1x128xf32> to vector<8x128xf32>
    %14 = arith.addf %11, %13 : vector<8x128xf32>
    %cst_11 = arith.constant 0.000000e+00 : f32
    %15 = vector.broadcast %cst_11 : f32 to vector<8x128xf32>
    %16 = arith.maximumf %14, %15 : vector<8x128xf32>
    %17 = arith.truncf %16 : vector<8x128xf32> to vector<8x128xbf16>
    %c0_12 = arith.constant 0 : index
    %c0_13 = arith.constant 0 : index
    %18 = vector.load %arg6[%c0_12, %c0_13] : memref<8x128xbf16, #tpu.memory_space<vmem>>, vector<8x128xbf16>
    tpu.vector_store %arg6[%c0_12, %c0_13], %17 {strides = array<i32>} : memref<8x128xbf16, #tpu.memory_space<vmem>>, vector<8x128xbf16>,
    return
  }
  func.func @transform_0(%arg0: i32) -> (i32, i32) {
    %c0_i32 = arith.constant 0 : i32
    %c0_i32_0 = arith.constant 0 : i32
    return %arg0, %c0_i32 : i32, i32
  }
  func.func @transform_1(%arg0: i32) -> (i32, i32) {
    %c0_i32 = arith.constant 0 : i32
    %c0_i32_0 = arith.constant 0 : i32
    %c0_i32_1 = arith.constant 0 : i32
    return %c0_i32, %c0_i32_0 : i32, i32
  }
  func.func @transform_2(%arg0: i32) -> (i32, i32) {
    %c0_i32 = arith.constant 0 : i32
    %c0_i32_0 = arith.constant 0 : i32
    %c0_i32_1 = arith.constant 0 : i32
    return %c0_i32, %c0_i32_0 : i32, i32
  }
  func.func @transform_3(%arg0: i32) -> (i32, i32) {
    %c0_i32 = arith.constant 0 : i32
    %c0_i32_0 = arith.constant 0 : i32
    %c0_i32_1 = arith.constant 0 : i32
    return %c0_i32, %c0_i32_0 : i32, i32
  }
  func.func @transform_4(%arg0: i32) -> (i32, i32) {
    %c0_i32 = arith.constant 0 : i32
    %c0_i32_0 = arith.constant 0 : i32
    %c0_i32_1 = arith.constant 0 : i32
    return %c0_i32, %c0_i32_0 : i32, i32
  }
  func.func @transform_5(%arg0: i32) -> (i32, i32) {
    %c0_i32 = arith.constant 0 : i32
    %c0_i32_0 = arith.constant 0 : i32
    return %arg0, %c0_i32 : i32, i32
  }
}

</mosaic_0001>

<llo_original>
// kernel: tpu_custom_call.1
$region0: #{tpu_custom_call.1}
  #allocation0 [shape = 'u32[]', space=smem, size = 0x4, offset = 0x4, fixed_abs, tag = 'smem constant byte address 0x4 - core index']
  #allocation1 [shape = 'u32[144,128]{1,0:T(1,128)}', space=vmem, size = 0x12000, scoped, tag = 'internal scratch']
  %s0 = inlined_call_operand.hbm [shape: f32[8,32], index: 0, kind: input, shape index: {}]
  %s1 = inlined_call_operand.hbm [shape: bf16[32,128], index: 1, kind: input, shape index: {}]
  %s2 = inlined_call_operand.vmem [shape: f32[1,128], index: 2, kind: input, shape index: {}]
  %s3 = inlined_call_operand.hbm [shape: bf16[128,128], index: 3, kind: input, shape index: {}]
  %s4 = inlined_call_operand.vmem [shape: f32[1,128], index: 4, kind: input, shape index: {}]
  %s5 = inlined_call_operand.hbm [shape: bf16[8,128], index: 5, kind: output, shape index: {}]
  %s6 = sld [smem:[#allocation0]]
  $region42: #{tpu_custom_call.1} parent=0
    _
  %s8 = ssub.s32 1, %s6
  %s9 = scalar_select 0, %s8, %s6
  $region1: #{tpu_custom_call.1} parent=0
    #allocation2 [shape = 'u8[4096]{0}', space=vmem, size = 0x1000, scoped, tag = 'input window, operand 0, single buffered']
    #allocation3 [shape = 's32[1]{0}', space=sflag, size = 0x4, scoped, tag = 'scoped memory for tpu_custom_call.1']
    #allocation4 [shape = 's32[1]{0}', space=sflag, size = 0x4, scoped, tag = 'scoped memory for tpu_custom_call.1']
    #allocation5 [shape = 'u8[8192]{0}', space=vmem, size = 0x2000, scoped, tag = 'input window, operand 1, single buffered']
    #allocation6 [shape = 's32[1]{0}', space=sflag, size = 0x4, scoped, tag = 'scoped memory for tpu_custom_call.1']
    #allocation7 [shape = 'u8[32768]{0}', space=vmem, size = 0x8000, scoped, tag = 'input window, operand 3, single buffered']
    #allocation8 [shape = 'u8[2048]{0}', space=vmem, size = 0x800, scoped, tag = 'output window, operand 0, single buffered']
    %10 = vsyncpa [#allocation3], 0
    %11 = vsyncpa [#allocation6], 0
    %12 = vsyncpa [#allocation4], 0
    // Predicated region
    $region2: #{tpu_custom_call.1} parent=1 // pred_check
      _
    $region3: #{tpu_custom_call.1} parent=1 // pred_check_branch
      %14 = sbr.rel (0) target = $region5
    $region4: #{tpu_custom_call.1} parent=1 // pred_region
      %s16 = ssub.s32 128, 128
      %17 = vsyncadd [#allocation3], %s16
      %s19 = sshll.u32 [#allocation2], 4
      %s20 = int_to_ptr.vmem [resolvable:$true] %s19
      %22 = dma.hbm_to_vmem [thread:$0]  %s0, 128, %s20, [#allocation3]
    $region5: #{tpu_custom_call.1} parent=1 // pred_fallthru
      _
    // Predicated region
    $region6: #{tpu_custom_call.1} parent=1 // pred_check
      _
    $region7: #{tpu_custom_call.1} parent=1 // pred_check_branch
      %24 = sbr.rel (0) target = $region9
    $region8: #{tpu_custom_call.1} parent=1 // pred_region
      %s26 = ssub.s32 256, 256
      %27 = vsyncadd [#allocation6], %s26
      %s28 = sshll.u32 [#allocation5], 4
      %s29 = int_to_ptr.vmem [resolvable:$true] %s28
      %34 = dma.hbm_to_vmem [thread:$0]  %s1, 256, %s29, [#allocation6], 64, 64, 4
    $region9: #{tpu_custom_call.1} parent=1 // pred_fallthru
      _
    // Predicated region
    $region10: #{tpu_custom_call.1} parent=1 // pred_check
      _
    $region11: #{tpu_custom_call.1} parent=1 // pred_check_branch
      %36 = sbr.rel (0) target = $region13
    $region12: #{tpu_custom_call.1} parent=1 // pred_region
      _
    $region13: #{tpu_custom_call.1} parent=1 // pred_fallthru
      _
    // Predicated region
    $region14: #{tpu_custom_call.1} parent=1 // pred_check
      _
    $region15: #{tpu_custom_call.1} parent=1 // pred_check_branch
      %38 = sbr.rel (0) target = $region17
    $region16: #{tpu_custom_call.1} parent=1 // pred_region
      %s40 = ssub.s32 1024, 1024
      %41 = vsyncadd [#allocation6], %s40
      %s42 = sshll.u32 [#allocation7], 4
      %s43 = int_to_ptr.vmem [resolvable:$true] %s42
      %48 = dma.hbm_to_vmem [thread:$0]  %s3, 1024, %s43, [#allocation6], 64, 64, 4
    $region17: #{tpu_custom_call.1} parent=1 // pred_fallthru
      _
    // Predicated region
    $region18: #{tpu_custom_call.1} parent=1 // pred_check
      _
    $region19: #{tpu_custom_call.1} parent=1 // pred_check_branch
      %50 = sbr.rel (0) target = $region21
    $region20: #{tpu_custom_call.1} parent=1 // pred_region
      _
    $region21: #{tpu_custom_call.1} parent=1 // pred_fallthru
      _
    // Predicated region
    $region22: #{tpu_custom_call.1} parent=1 // pred_check
      _
    $region23: #{tpu_custom_call.1} parent=1 // pred_check_branch
      %52 = sbr.rel (0) target = $region25
    $region24: #{tpu_custom_call.1} parent=1 // pred_region
      %53 = dma.done [#allocation3], 128
    $region25: #{tpu_custom_call.1} parent=1 // pred_fallthru
      _
    // Predicated region
    $region26: #{tpu_custom_call.1} parent=1 // pred_check
      _
    $region27: #{tpu_custom_call.1} parent=1 // pred_check_branch
      %55 = sbr.rel (0) target = $region29
    $region28: #{tpu_custom_call.1} parent=1 // pred_region
      %56 = dma.done [#allocation6], 256
    $region29: #{tpu_custom_call.1} parent=1 // pred_fallthru
      _
    // Predicated region
    $region30: #{tpu_custom_call.1} parent=1 // pred_check
      _
    $region31: #{tpu_custom_call.1} parent=1 // pred_check_branch
      %58 = sbr.rel (0) target = $region33
    $region32: #{tpu_custom_call.1} parent=1 // pred_region
      %59 = dma.done [#allocation6], 1024
    $region33: #{tpu_custom_call.1} parent=1 // pred_fallthru
      _
    %v61 = vld [vmem:[#allocation2] sm:$0xff]
    %v62 = vpack.c.bf16 %v61, %v61
    %v63 = vld [vmem:[#allocation5] sm:$0xf]
    %v64 = vld [vmem:[#allocation5 + $0x4] sm:$0xf]
    %v65 = vld [vmem:[#allocation5 + $0x8] sm:$0xf]
    %v66 = vld [vmem:[#allocation5 + $0xc] sm:$0xf]
    %v67 = vld [vmem:[%s2] sm:$0x1]
    %v69 = vlaneseq
    %v70 = vshrl.u32 %v69, 7
    %v71 = vsub.s32 0, %v70
    %v72 = vrot.slane %v67, %v71
    %v78 = vunpack.c.l.b16 %v63
    %v79 = vunpack.c.l.b16 %v64
    %v80 = vunpack.c.l.b16 %v65
    %v81 = vunpack.c.l.b16 %v66
    %v82 = vpack.c.b16 %v79, %v78
    %v83 = vpack.c.b16 %v81, %v80
    %vm86 = vcmask 261120
    %v88 = vsel %vm86, %v62, 0
    %90 = vmatprep.subr.bf16.mxu0 0
    %91 = vmatpush1.bf16.msra.mxu0 0
    %92 = vmatprep.subr.bf16.mxu0 0
    %93 = vmatpush1.bf16.msra.mxu0 0
    %94 = vmatprep.subr.bf16.mxu0 0
    %95 = vmatpush1.bf16.msra.mxu0 0
    %96 = vmatprep.subr.bf16.mxu0 0
    %97 = vmatpush1.bf16.msra.mxu0 0
    %98 = vmatprep.subr.bf16.mxu0 0
    %99 = vmatpush1.bf16.msra.mxu0 0
    %100 = vmatprep.subr.bf16.mxu0 0
    %101 = vmatpush1.bf16.msra.mxu0 0
    %102 = vmatprep.subr.bf16.mxu0 0
    %103 = vmatpush1.bf16.msra.mxu0 %v83
    %104 = vmatprep.subr.bf16.mxu0 0
    %105 = vmatpush1.bf16.msra.mxu0 %v82
    %106 = vmatprep.subr.bf16.mxu0 0
    %107 = vmatpush2.bf16.msra.mxu0 0
    %108 = vmatprep.subr.bf16.mxu0 0
    %109 = vmatpush2.bf16.msra.mxu0 0
    %110 = vmatprep.subr.bf16.mxu0 0
    %111 = vmatpush2.bf16.msra.mxu0 0
    %112 = vmatprep.subr.bf16.mxu0 0
    %113 = vmatpush2.bf16.msra.mxu0 0
    %114 = vmatprep.subr.bf16.mxu0 0
    %115 = vmatpush2.bf16.msra.mxu0 0
    %116 = vmatprep.subr.bf16.mxu0 0
    %117 = vmatpush2.bf16.msra.mxu0 0
    %118 = vmatprep.subr.bf16.mxu0 0
    %119 = vmatpush2.bf16.msra.mxu0 0
    %120 = vmatprep.subr.bf16.mxu0 0
    %121 = vmatpush2.bf16.msra.mxu0 0
    %122 = vmatprep.mubr.bf16.mxu0 0
    %123 = vmatmul.mubr.bf16.gmra.mxu0 %v88
    %v124 = vpop.f32.mrf.mxu0
    %v125 = vadd.f32 %v72, %v124
    %v126 = vpop.f32.mrf.mxu0
    %v127 = vpop.f32.mrf.mxu0
    %v128 = vpop.f32.mrf.mxu0
    %129 = vdwg.mxu0
    %v130 = vmax.f32 %v125, 0.0
    %v131 = vpack.c.bf16 %v130, %v130
    %v132 = vld [vmem:[#allocation7] sm:$0xf]
    %v133 = vld [vmem:[#allocation7 + $0x4] sm:$0xf]
    %v134 = vld [vmem:[#allocation7 + $0x8] sm:$0xf]
    %v135 = vld [vmem:[#allocation7 + $0xc] sm:$0xf]
    %v136 = vld [vmem:[#allocation7 + $0x10] sm:$0xf]
    %v137 = vld [vmem:[#allocation7 + $0x14] sm:$0xf]
    %v138 = vld [vmem:[#allocation7 + $0x18] sm:$0xf]
    %v139 = vld [vmem:[#allocation7 + $0x1c] sm:$0xf]
    %v140 = vld [vmem:[#allocation7 + $0x20] sm:$0xf]
    %v141 = vld [vmem:[#allocation7 + $0x24] sm:$0xf]
    %v142 = vld [vmem:[#allocation7 + $0x28] sm:$0xf]
    %v143 = vld [vmem:[#allocation7 + $0x2c] sm:$0xf]
    %v144 = vld [vmem:[#allocation7 + $0x30] sm:$0xf]
    %v145 = vld [vmem:[#allocation7 + $0x34] sm:$0xf]
    %v146 = vld [vmem:[#allocation7 + $0x38] sm:$0xf]
    %v147 = vld [vmem:[#allocation7 + $0x3c] sm:$0xf]
    %v148 = vld [vmem:[%s4] sm:$0x1]
    %v150 = vlaneseq
    %v151 = vshrl.u32 %v150, 7
    %v152 = vsub.s32 0, %v151
    %v153 = vrot.slane %v148, %v152
    %v171 = vunpack.c.l.b16 %v132
    %v172 = vunpack.c.l.b16 %v133
    %v173 = vunpack.c.l.b16 %v134
    %v174 = vunpack.c.l.b16 %v135
    %v175 = vunpack.c.l.b16 %v136
    %v176 = vunpack.c.l.b16 %v137
    %v177 = vunpack.c.l.b16 %v138
    %v178 = vunpack.c.l.b16 %v139
    %v179 = vunpack.c.l.b16 %v140
    %v180 = vunpack.c.l.b16 %v141
    %v181 = vunpack.c.l.b16 %v142
    %v182 = vunpack.c.l.b16 %v143
    %v183 = vunpack.c.l.b16 %v144
    %v184 = vunpack.c.l.b16 %v145
    %v185 = vunpack.c.l.b16 %v146
    %v186 = vunpack.c.l.b16 %v147
    %v187 = vpack.c.b16 %v172, %v171
    %v188 = vpack.c.b16 %v174, %v173
    %v189 = vpack.c.b16 %v176, %v175
    %v190 = vpack.c.b16 %v178, %v177
    %v191 = vpack.c.b16 %v180, %v179
    %v192 = vpack.c.b16 %v182, %v181
    %v193 = vpack.c.b16 %v184, %v183
    %v194 = vpack.c.b16 %v186, %v185
    %203 = vmatprep.subr.bf16.mxu0 0
    %204 = vmatpush1.bf16.msra.mxu0 %v194
    %205 = vmatprep.subr.bf16.mxu0 0
    %206 = vmatpush1.bf16.msra.mxu0 %v193
    %207 = vmatprep.subr.bf16.mxu0 0
    %208 = vmatpush1.bf16.msra.mxu0 %v192
    %209 = vmatprep.subr.bf16.mxu0 0
    %210 = vmatpush1.bf16.msra.mxu0 %v191
    %211 = vmatprep.subr.bf16.mxu0 0
    %212 = vmatpush1.bf16.msra.mxu0 %v190
    %213 = vmatprep.subr.bf16.mxu0 0
    %214 = vmatpush1.bf16.msra.mxu0 %v189
    %215 = vmatprep.subr.bf16.mxu0 0
    %216 = vmatpush1.bf16.msra.mxu0 %v188
    %217 = vmatprep.subr.bf16.mxu0 0
    %218 = vmatpush1.bf16.msra.mxu0 %v187
    %219 = vmatprep.subr.bf16.mxu0 0
    %220 = vmatpush2.bf16.msra.mxu0 0
    %221 = vmatprep.subr.bf16.mxu0 0
    %222 = vmatpush2.bf16.msra.mxu0 0
    %223 = vmatprep.subr.bf16.mxu0 0
    %224 = vmatpush2.bf16.msra.mxu0 0
    %225 = vmatprep.subr.bf16.mxu0 0
    %226 = vmatpush2.bf16.msra.mxu0 0
    %227 = vmatprep.subr.bf16.mxu0 0
    %228 = vmatpush2.bf16.msra.mxu0 0
    %229 = vmatprep.subr.bf16.mxu0 0
    %230 = vmatpush2.bf16.msra.mxu0 0
    %231 = vmatprep.subr.bf16.mxu0 0
    %232 = vmatpush2.bf16.msra.mxu0 0
    %233 = vmatprep.subr.bf16.mxu0 0
    %234 = vmatpush2.bf16.msra.mxu0 0
    %235 = vmatprep.mubr.bf16.mxu0 0
    %236 = vmatmul.mubr.bf16.gmra.mxu0 %v131
    %v237 = vpop.f32.mrf.mxu0
    %v238 = vadd.f32 %v153, %v237
    %v239 = vpop.f32.mrf.mxu0
    %v240 = vpop.f32.mrf.mxu0
    %v241 = vpop.f32.mrf.mxu0
    %242 = vdwg.mxu0
    %v243 = vmax.f32 %v238, 0.0
    %v244 = vpack.c.bf16 %v243, %v243
    %245 = vst [vmem:[#allocation8] sm:$0xf] %v244
    // Predicated region
    $region34: #{tpu_custom_call.1} parent=1 // pred_check
      _
    $region35: #{tpu_custom_call.1} parent=1 // pred_check_branch
      %247 = sbr.rel (0) target = $region37
    $region36: #{tpu_custom_call.1} parent=1 // pred_region
      %s249 = ssub.s32 64, 64
      %250 = vsyncadd [#allocation4], %s249
      %s252 = sshll.u32 [#allocation8], 4
      %s253 = int_to_ptr.vmem [resolvable:$true] %s252
      %255 = dma.vmem_to_hbm [thread:$0]  %s253, 64, %s5, [#allocation4]
    $region37: #{tpu_custom_call.1} parent=1 // pred_fallthru
      _
    // Predicated region
    $region38: #{tpu_custom_call.1} parent=1 // pred_check
      _
    $region39: #{tpu_custom_call.1} parent=1 // pred_check_branch
      %257 = sbr.rel (0) target = $region41
    $region40: #{tpu_custom_call.1} parent=1 // pred_region
      %258 = dma.done [#allocation4], 64
    $region41: #{tpu_custom_call.1} parent=1 // pred_fallthru
      _
    %259 = vsyncpa [#allocation3], 1
    %260 = vsyncpa [#allocation6], 1
    %261 = vsyncpa [#allocation4], 1

</llo_original>
